<compile_context>
chip_gen: v7x
topology: tpu7x:2x2x1
jax: 0.10.0
libtpu: 0.0.40
codegen_flags: <defaults>
</compile_context>

<pallas_src>
import jax
import jax.numpy as jnp
from jax import lax
from jax.experimental import pallas as pl
from jax.experimental.pallas import tpu as pltpu

EPS = 1e-12     # torch.nn.functional.normalize default eps
LANE = 128


def _round_up(v, m):
    return ((v + m - 1) // m) * m


def _l2_normalize_last(x):
    # matches F.normalize: x / max(||x||_2, eps), via rsqrt on the EUP
    ss = jnp.sum(x * x, axis=-1, keepdims=True)
    return x * lax.rsqrt(jnp.maximum(ss, EPS * EPS))


def _eaa_kernel(x_ref, wqk_ref, bqk_ref, wa_ref, wp_ref, bp_ref, wf_ref, bf_ref, o_ref):
    # x_ref: (Bt, N, D); wqk: (D, 2*Tp); biases/wa: (1, *); wp/wf: (Tp, Tp); o: (Bt, N, Tp)
    Bt, N, D = x_ref.shape
    Tp = wp_ref.shape[0]
    rows = Bt * N
    mxu_dtype = wqk_ref.dtype          # f32, or bf16 when the caller pre-cast weights

    xf = x_ref[...].reshape(rows, D).astype(mxu_dtype)

    # Fused Q/K projection: one matmul, f32 accumulation.
    proj = jnp.dot(xf, wqk_ref[...], preferred_element_type=jnp.float32) + bqk_ref[...]
    query = _l2_normalize_last(proj[:, :Tp])        # (rows, Tp), padded lanes stay zero
    key = _l2_normalize_last(proj[:, Tp:])          # (rows, Tp)

    # Additive attention weights; scale_factor already folded into w_a.
    qw = jnp.sum(query * wa_ref[...], axis=-1, keepdims=True)        # (rows, 1)

    # Normalize A over the token axis per batch element, then pool the query.
    qw3 = qw.reshape(Bt, N, 1)
    a_ss = jnp.sum(qw3 * qw3, axis=1, keepdims=True)                 # (Bt, 1, 1)
    A = qw3 * lax.rsqrt(jnp.maximum(a_ss, EPS * EPS))                # (Bt, N, 1)
    qvec = jnp.sum(A * query.reshape(Bt, N, Tp), axis=1, keepdims=True)   # (Bt, 1, Tp)

    gated = (qvec * key.reshape(Bt, N, Tp)).reshape(rows, Tp)

    out = jnp.dot(gated.astype(mxu_dtype), wp_ref[...],
                  preferred_element_type=jnp.float32) + bp_ref[...] + query
    out = jnp.dot(out.astype(mxu_dtype), wf_ref[...],
                  preferred_element_type=jnp.float32) + bf_ref[...]

    o_ref[...] = out.reshape(Bt, N, Tp).astype(o_ref.dtype)


def _pick_block_batch(B, N):
    """Batch elements per grid step: grow rows toward MXU fill (cap ~256 rows) while
    keeping >= 2 grid steps when B allows (v7x has 2 TensorCores on the parallel axis)."""
    best = 1
    for d in range(1, B + 1):
        if B % d:
            continue
        if d > 1 and d * N > 256:
            continue
        if B >= 2 and B // d < 2:
            continue
        best = d
    return best


def prepare_params(params, mxu_dtype=None):
    """Pad token_dim to a 128-lane multiple, fuse Q/K weights, fold scale into w_a."""
    D, T = params["wq"].shape
    Tp = _round_up(T, LANE)
    w_dtype = mxu_dtype if mxu_dtype is not None else params["wq"].dtype

    def pad_cols(a):
        return jnp.pad(a, ((0, 0), (0, Tp - a.shape[1])))

    wqk = jnp.concatenate([pad_cols(params["wq"]), pad_cols(params["wk"])],
                          axis=1).astype(w_dtype)                        # (D, 2*Tp)
    bqk = jnp.concatenate([pad_cols(params["bq"]), pad_cols(params["bk"])],
                          axis=1).astype(jnp.float32)                    # (1, 2*Tp)
    wa = pad_cols(params["wa"] * params["scale"][0, 0]).astype(jnp.float32)  # (1, Tp)
    wp = jnp.pad(params["wp"], ((0, Tp - T), (0, Tp - T))).astype(w_dtype)
    wf = jnp.pad(params["wf"], ((0, Tp - T), (0, Tp - T))).astype(w_dtype)
    bp = pad_cols(params["bp"]).astype(jnp.float32)
    bf = pad_cols(params["bf"]).astype(jnp.float32)
    return dict(wqk=wqk, bqk=bqk, wa=wa, wp=wp, bp=bp, wf=wf, bf=bf, T=T, Tp=Tp)


def efficient_additive_attention(x, params, mxu_dtype=None):
    B, N, D = x.shape
    pp = prepare_params(params, mxu_dtype)
    T, Tp = pp["T"], pp["Tp"]
    Bt = _pick_block_batch(B, N)
    grid = (B // Bt,)

    def w2d(shape):
        return pl.BlockSpec(shape, lambda b: (0, 0))

    out = pl.pallas_call(
        _eaa_kernel,
        out_shape=jax.ShapeDtypeStruct((B, N, Tp), x.dtype),
        grid_spec=pltpu.PrefetchScalarGridSpec(
            num_scalar_prefetch=0,
            grid=grid,
            in_specs=[
                pl.BlockSpec((Bt, N, D), lambda b: (b, 0, 0)),   # x
                w2d((D, 2 * Tp)),                                # wq|wk fused
                w2d((1, 2 * Tp)),                                # bq|bk fused
                w2d((1, Tp)),                                    # w_a (scale folded in)
                w2d((Tp, Tp)),                                   # Proj weight
                w2d((1, Tp)),                                    # Proj bias
                w2d((Tp, Tp)),                                   # final weight
                w2d((1, Tp)),                                    # final bias
            ],
            out_specs=pl.BlockSpec((Bt, N, Tp), lambda b: (b, 0, 0)),
        ),
        compiler_params=pltpu.CompilerParams(
            dimension_semantics=("parallel",)),
    )(x, pp["wqk"], pp["bqk"], pp["wa"], pp["wp"], pp["bp"], pp["wf"], pp["bf"])

    return out[:, :, :T]


def reference(x, p):
    # pure-JAX reference mirroring the PyTorch forward
    def l2n(v, axis):
        n = jnp.sqrt(jnp.sum(v * v, axis=axis, keepdims=True))
        return v / jnp.maximum(n, EPS)

    query = x @ p["wq"] + p["bq"]
    key = x @ p["wk"] + p["bk"]
    query = l2n(query, axis=-1)
    key = l2n(key, axis=-1)
    qw = jnp.sum(query * p["wa"], axis=-1, keepdims=True)    # (B, N, 1)
    A = qw * p["scale"][0, 0]
    A = l2n(A, axis=1)                                       # normalize over tokens
    q = jnp.sum(A * query, axis=1, keepdims=True)            # (B, 1, T)
    out = (q * key) @ p["wp"] + p["bp"] + query
    out = out @ p["wf"] + p["bf"]
    return out


def init_params(key, in_dims, token_dim):
    ks = jax.random.split(key, 9)
    s_in = 1.0 / jnp.sqrt(in_dims)
    s_tok = 1.0 / jnp.sqrt(token_dim)
    return {
        "wq": jax.random.uniform(ks[0], (in_dims, token_dim), jnp.float32, -s_in, s_in),
        "bq": jax.random.uniform(ks[1], (1, token_dim), jnp.float32, -s_in, s_in),
        "wk": jax.random.uniform(ks[2], (in_dims, token_dim), jnp.float32, -s_in, s_in),
        "bk": jax.random.uniform(ks[3], (1, token_dim), jnp.float32, -s_in, s_in),
        "wa": jax.random.normal(ks[4], (1, token_dim), jnp.float32),  # w_a stored as row
        "wp": jax.random.uniform(ks[5], (token_dim, token_dim), jnp.float32, -s_tok, s_tok),
        "bp": jax.random.uniform(ks[6], (1, token_dim), jnp.float32, -s_tok, s_tok),
        "wf": jax.random.uniform(ks[7], (token_dim, token_dim), jnp.float32, -s_tok, s_tok),
        "bf": jax.random.uniform(ks[8], (1, token_dim), jnp.float32, -s_tok, s_tok),
        "scale": jnp.full((1, 1), token_dim ** (-0.5), jnp.float32),
    }


if __name__ == "__main__":
    B, N, D = 2, 8, 32        # in_dims = token_dim = 32 for this synthetic instance
    token_dim = 32

    key = jax.random.PRNGKey(0)
    kx, kp = jax.random.split(key)
    x = jax.random.normal(kx, (B, N, D), jnp.float32)
    params = init_params(kp, D, token_dim)

    # f32 path (exact check against the pure-JAX reference)
    out = jax.block_until_ready(efficient_additive_attention(x, params))
    ref = reference(x, params)
    assert out.shape == (B, N, token_dim)
    assert jnp.allclose(out, ref, atol=1e-5, rtol=1e-5), "f32 mismatch vs pure-JAX reference"

    # bf16-MXU-input path (v6e/v7x optimization); elementwise math stays f32 — loose check only.
    out_bf16 = jax.block_until_ready(
        efficient_additive_attention(x, params, mxu_dtype=jnp.bfloat16))
    assert out_bf16.shape == (B, N, token_dim)
    assert jnp.allclose(out_bf16, ref, atol=1e-1, rtol=1e-1), "bf16 mismatch vs reference"

    print("KERNEL_OK")
</pallas_src>

<mosaic_0001>
module attributes {stable_mosaic.version = 11 : i64} {
  func.func @_eaa_kernel(%arg0: i32, %arg1: memref<1x8x32xf32, #tpu.memory_space<vmem>>, %arg2: memref<32x256xf32, #tpu.memory_space<vmem>>, %arg3: memref<1x256xf32, #tpu.memory_space<vmem>>, %arg4: memref<1x128xf32, #tpu.memory_space<vmem>>, %arg5: memref<128x128xf32, #tpu.memory_space<vmem>>, %arg6: memref<1x128xf32, #tpu.memory_space<vmem>>, %arg7: memref<128x128xf32, #tpu.memory_space<vmem>>, %arg8: memref<1x128xf32, #tpu.memory_space<vmem>>, %arg9: memref<1x8x128xf32, #tpu.memory_space<vmem>>) attributes {dimension_semantics = [#tpu.dimension_semantics<parallel>], iteration_bounds = array<i64: 2>, scalar_prefetch = 0 : i64, scratch_operands = 0 : i64, tpu.core_type = #tpu.core_type<tc>, window_params = [{transform_indices = @transform_0, window_bounds = array<i64: 1, 8, 32>}, {pipeline_mode = #tpu.pipeline_mode<synchronous>, transform_indices = @transform_1, window_bounds = array<i64: 32, 256>}, {pipeline_mode = #tpu.pipeline_mode<synchronous>, transform_indices = @transform_2, window_bounds = array<i64: 1, 256>}, {pipeline_mode = #tpu.pipeline_mode<synchronous>, transform_indices = @transform_3, window_bounds = array<i64: 1, 128>}, {pipeline_mode = #tpu.pipeline_mode<synchronous>, transform_indices = @transform_4, window_bounds = array<i64: 128, 128>}, {pipeline_mode = #tpu.pipeline_mode<synchronous>, transform_indices = @transform_5, window_bounds = array<i64: 1, 128>}, {pipeline_mode = #tpu.pipeline_mode<synchronous>, transform_indices = @transform_6, window_bounds = array<i64: 128, 128>}, {pipeline_mode = #tpu.pipeline_mode<synchronous>, transform_indices = @transform_7, window_bounds = array<i64: 1, 128>}, {transform_indices = @transform_8, window_bounds = array<i64: 1, 8, 128>}]} {
    %c0 = arith.constant 0 : index
    %c0_0 = arith.constant 0 : index
    %c0_1 = arith.constant 0 : index
    %0 = vector.load %arg1[%c0, %c0_0, %c0_1] : memref<1x8x32xf32, #tpu.memory_space<vmem>>, vector<1x8x32xf32>
    %1 = vector.shape_cast %0 : vector<1x8x32xf32> to vector<8x32xf32>
    %c0_2 = arith.constant 0 : index
    %c0_3 = arith.constant 0 : index
    %2 = vector.load %arg2[%c0_2, %c0_3] : memref<32x256xf32, #tpu.memory_space<vmem>>, vector<32x256xf32>
    %cst = arith.constant dense<0.000000e+00> : vector<8x256xf32>
    %3 = tpu.matmul %1, %2, %cst {dimension_numbers = #tpu.dot_dimension_numbers<[1], [0], [0], [1], [0, 0, 1, 1], [], []>} : vector<8x32xf32>, vector<32x256xf32>, vector<8x256xf32> -> vector<8x256xf32>
    %c0_4 = arith.constant 0 : index
    %c0_5 = arith.constant 0 : index
    %4 = vector.load %arg3[%c0_4, %c0_5] : memref<1x256xf32, #tpu.memory_space<vmem>>, vector<1x256xf32>
    %5 = vector.broadcast %4 : vector<1x256xf32> to vector<8x256xf32>
    %6 = arith.addf %3, %5 : vector<8x256xf32>
    %7 = vector.extract_strided_slice %6 {offsets = [0, 0], sizes = [8, 128], strides = [1, 1]} : vector<8x256xf32> to vector<8x128xf32>
    %8 = arith.mulf %7, %7 : vector<8x128xf32>
    %cst_6 = arith.constant dense<0.000000e+00> : vector<8xf32>
    %9 = vector.multi_reduction <add>, %8, %cst_6 [1] : vector<8x128xf32> to vector<8xf32>
    %10 = vector.shape_cast %9 : vector<8xf32> to vector<8x1xf32>
    %cst_7 = arith.constant 1.000000e-24 : f32
    %11 = vector.broadcast %cst_7 : f32 to vector<8x1xf32>
    %12 = arith.maximumf %10, %11 : vector<8x1xf32>
    %13 = math.rsqrt %12 : vector<8x1xf32>
    %14 = vector.broadcast %13 : vector<8x1xf32> to vector<8x128xf32>
    %15 = arith.mulf %7, %14 : vector<8x128xf32>
    %16 = vector.extract_strided_slice %6 {offsets = [0, 128], sizes = [8, 128], strides = [1, 1]} : vector<8x256xf32> to vector<8x128xf32>
    %17 = arith.mulf %16, %16 : vector<8x128xf32>
    %cst_8 = arith.constant dense<0.000000e+00> : vector<8xf32>
    %18 = vector.multi_reduction <add>, %17, %cst_8 [1] : vector<8x128xf32> to vector<8xf32>
    %19 = vector.shape_cast %18 : vector<8xf32> to vector<8x1xf32>
    %cst_9 = arith.constant 1.000000e-24 : f32
    %20 = vector.broadcast %cst_9 : f32 to vector<8x1xf32>
    %21 = arith.maximumf %19, %20 : vector<8x1xf32>
    %22 = math.rsqrt %21 : vector<8x1xf32>
    %23 = vector.broadcast %22 : vector<8x1xf32> to vector<8x128xf32>
    %24 = arith.mulf %16, %23 : vector<8x128xf32>
    %c0_10 = arith.constant 0 : index
    %c0_11 = arith.constant 0 : index
    %25 = vector.load %arg4[%c0_10, %c0_11] : memref<1x128xf32, #tpu.memory_space<vmem>>, vector<1x128xf32>
    %26 = vector.broadcast %25 : vector<1x128xf32> to vector<8x128xf32>
    %27 = arith.mulf %15, %26 : vector<8x128xf32>
    %cst_12 = arith.constant dense<0.000000e+00> : vector<8xf32>
    %28 = vector.multi_reduction <add>, %27, %cst_12 [1] : vector<8x128xf32> to vector<8xf32>
    %29 = vector.shape_cast %28 : vector<8xf32> to vector<8x1xf32>
    %30 = vector.shape_cast %29 : vector<8x1xf32> to vector<1x8x1xf32>
    %31 = arith.mulf %30, %30 : vector<1x8x1xf32>
    %cst_13 = arith.constant dense<0.000000e+00> : vector<1x1xf32>
    %32 = vector.multi_reduction <add>, %31, %cst_13 [1] : vector<1x8x1xf32> to vector<1x1xf32>
    %33 = vector.shape_cast %32 : vector<1x1xf32> to vector<1x1x1xf32>
    %cst_14 = arith.constant 1.000000e-24 : f32
    %34 = vector.broadcast %cst_14 : f32 to vector<1x1x1xf32>
    %35 = arith.maximumf %33, %34 : vector<1x1x1xf32>
    %36 = math.rsqrt %35 : vector<1x1x1xf32>
    %37 = vector.broadcast %36 : vector<1x1x1xf32> to vector<1x8x1xf32>
    %38 = arith.mulf %30, %37 : vector<1x8x1xf32>
    %39 = vector.shape_cast %15 : vector<8x128xf32> to vector<1x8x128xf32>
    %40 = vector.broadcast %38 : vector<1x8x1xf32> to vector<1x8x128xf32>
    %41 = arith.mulf %40, %39 : vector<1x8x128xf32>
    %cst_15 = arith.constant dense<0.000000e+00> : vector<1x128xf32>
    %42 = vector.multi_reduction <add>, %41, %cst_15 [1] : vector<1x8x128xf32> to vector<1x128xf32>
    %43 = vector.shape_cast %42 : vector<1x128xf32> to vector<1x1x128xf32>
    %44 = vector.shape_cast %24 : vector<8x128xf32> to vector<1x8x128xf32>
    %45 = vector.broadcast %43 : vector<1x1x128xf32> to vector<1x8x128xf32>
    %46 = arith.mulf %45, %44 : vector<1x8x128xf32>
    %47 = vector.shape_cast %46 : vector<1x8x128xf32> to vector<8x128xf32>
    %c0_16 = arith.constant 0 : index
    %c0_17 = arith.constant 0 : index
    %48 = vector.load %arg5[%c0_16, %c0_17] : memref<128x128xf32, #tpu.memory_space<vmem>>, vector<128x128xf32>
    %cst_18 = arith.constant dense<0.000000e+00> : vector<8x128xf32>
    %49 = tpu.matmul %47, %48, %cst_18 {dimension_numbers = #tpu.dot_dimension_numbers<[1], [0], [0], [1], [0, 0, 1, 1], [], []>} : vector<8x128xf32>, vector<128x128xf32>, vector<8x128xf32> -> vector<8x128xf32>
    %c0_19 = arith.constant 0 : index
    %c0_20 = arith.constant 0 : index
    %50 = vector.load %arg6[%c0_19, %c0_20] : memref<1x128xf32, #tpu.memory_space<vmem>>, vector<1x128xf32>
    %51 = vector.broadcast %50 : vector<1x128xf32> to vector<8x128xf32>
    %52 = arith.addf %49, %51 : vector<8x128xf32>
    %53 = arith.addf %52, %15 : vector<8x128xf32>
    %c0_21 = arith.constant 0 : index
    %c0_22 = arith.constant 0 : index
    %54 = vector.load %arg7[%c0_21, %c0_22] : memref<128x128xf32, #tpu.memory_space<vmem>>, vector<128x128xf32>
    %cst_23 = arith.constant dense<0.000000e+00> : vector<8x128xf32>
    %55 = tpu.matmul %53, %54, %cst_23 {dimension_numbers = #tpu.dot_dimension_numbers<[1], [0], [0], [1], [0, 0, 1, 1], [], []>} : vector<8x128xf32>, vector<128x128xf32>, vector<8x128xf32> -> vector<8x128xf32>
    %c0_24 = arith.constant 0 : index
    %c0_25 = arith.constant 0 : index
    %56 = vector.load %arg8[%c0_24, %c0_25] : memref<1x128xf32, #tpu.memory_space<vmem>>, vector<1x128xf32>
    %57 = vector.broadcast %56 : vector<1x128xf32> to vector<8x128xf32>
    %58 = arith.addf %55, %57 : vector<8x128xf32>
    %59 = vector.shape_cast %58 : vector<8x128xf32> to vector<1x8x128xf32>
    %c0_26 = arith.constant 0 : index
    %c0_27 = arith.constant 0 : index
    %c0_28 = arith.constant 0 : index
    %60 = vector.load %arg9[%c0_26, %c0_27, %c0_28] : memref<1x8x128xf32, #tpu.memory_space<vmem>>, vector<1x8x128xf32>
    tpu.vector_store %arg9[%c0_26, %c0_27, %c0_28], %59 {strides = array<i32>} : memref<1x8x128xf32, #tpu.memory_space<vmem>>, vector<1x8x128xf32>,
    return
  }
  func.func @transform_0(%arg0: i32) -> (i32, i32, i32) {
    %c0_i32 = arith.constant 0 : i32
    %c0_i32_0 = arith.constant 0 : i32
    %c0_i32_1 = arith.constant 0 : i32
    return %arg0, %c0_i32, %c0_i32_0 : i32, i32, i32
  }
  func.func @transform_1(%arg0: i32) -> (i32, i32) {
    %c0_i32 = arith.constant 0 : i32
    %c0_i32_0 = arith.constant 0 : i32
    %c0_i32_1 = arith.constant 0 : i32
    return %c0_i32, %c0_i32_0 : i32, i32
  }
  func.func @transform_2(%arg0: i32) -> (i32, i32) {
    %c0_i32 = arith.constant 0 : i32
    %c0_i32_0 = arith.constant 0 : i32
    %c0_i32_1 = arith.constant 0 : i32
    return %c0_i32, %c0_i32_0 : i32, i32
  }
  func.func @transform_3(%arg0: i32) -> (i32, i32) {
    %c0_i32 = arith.constant 0 : i32
    %c0_i32_0 = arith.constant 0 : i32
    %c0_i32_1 = arith.constant 0 : i32
    return %c0_i32, %c0_i32_0 : i32, i32
  }
  func.func @transform_4(%arg0: i32) -> (i32, i32) {
    %c0_i32 = arith.constant 0 : i32
    %c0_i32_0 = arith.constant 0 : i32
    %c0_i32_1 = arith.constant 0 : i32
    return %c0_i32, %c0_i32_0 : i32, i32
  }
  func.func @transform_5(%arg0: i32) -> (i32, i32) {
    %c0_i32 = arith.constant 0 : i32
    %c0_i32_0 = arith.constant 0 : i32
    %c0_i32_1 = arith.constant 0 : i32
    return %c0_i32, %c0_i32_0 : i32, i32
  }
  func.func @transform_6(%arg0: i32) -> (i32, i32) {
    %c0_i32 = arith.constant 0 : i32
    %c0_i32_0 = arith.constant 0 : i32
    %c0_i32_1 = arith.constant 0 : i32
    return %c0_i32, %c0_i32_0 : i32, i32
  }
  func.func @transform_7(%arg0: i32) -> (i32, i32) {
    %c0_i32 = arith.constant 0 : i32
    %c0_i32_0 = arith.constant 0 : i32
    %c0_i32_1 = arith.constant 0 : i32
    return %c0_i32, %c0_i32_0 : i32, i32
  }
  func.func @transform_8(%arg0: i32) -> (i32, i32, i32) {
    %c0_i32 = arith.constant 0 : i32
    %c0_i32_0 = arith.constant 0 : i32
    %c0_i32_1 = arith.constant 0 : i32
    return %arg0, %c0_i32, %c0_i32_0 : i32, i32, i32
  }
}

</mosaic_0001>

<llo_original>
// kernel: tpu_custom_call.1
$region0: #{tpu_custom_call.1}
  #allocation0 [shape = 'u32[]', space=smem, size = 0x4, offset = 0x4, fixed_abs, tag = 'smem constant byte address 0x4 - core index']
  #allocation1 [shape = 'u32[144,128]{1,0:T(1,128)}', space=vmem, size = 0x12000, scoped, tag = 'internal scratch']
  %s0 = inlined_call_operand.hbm [shape: f32[2,8,32], index: 0, kind: input, shape index: {}]
  %s1 = inlined_call_operand.hbm [shape: f32[32,256], index: 1, kind: input, shape index: {}]
  %s2 = inlined_call_operand.vmem [shape: f32[1,256], index: 2, kind: input, shape index: {}]
  %s3 = inlined_call_operand.vmem [shape: f32[1,128], index: 3, kind: input, shape index: {}]
  %s4 = inlined_call_operand.hbm [shape: f32[128,128], index: 4, kind: input, shape index: {}]
  %s5 = inlined_call_operand.vmem [shape: f32[1,128], index: 5, kind: input, shape index: {}]
  %s6 = inlined_call_operand.hbm [shape: f32[128,128], index: 6, kind: input, shape index: {}]
  %s7 = inlined_call_operand.vmem [shape: f32[1,128], index: 7, kind: input, shape index: {}]
  %s8 = inlined_call_operand.hbm [shape: f32[2,8,128], index: 8, kind: output, shape index: {}]
  %s9 = sld [smem:[#allocation0]]
  $region81: #{tpu_custom_call.1} parent=0
    _
  %s11 = ssub.s32 1, %s9
  %s12 = scalar_select 0, %s11, %s9
  $region1: #{tpu_custom_call.1} parent=0
    #allocation2 [shape = 'u8[8192]{0}', space=vmem, size = 0x2000, scoped, tag = 'input window, operand 0']
    #allocation3 [shape = 's32[2]{0}', space=sflag, size = 0x8, scoped, tag = 'scoped memory for tpu_custom_call.1']
    #allocation4 [shape = 's32[2]{0}', space=sflag, size = 0x8, scoped, tag = 'scoped memory for tpu_custom_call.1']
    #allocation5 [shape = 'u8[32768]{0}', space=vmem, size = 0x8000, scoped, tag = 'input window, operand 1, single buffered']
    #allocation6 [shape = 's32[1]{0}', space=sflag, size = 0x4, scoped, tag = 'scoped memory for tpu_custom_call.1']
    #allocation7 [shape = 'u8[65536]{0}', space=vmem, size = 0x10000, scoped, tag = 'input window, operand 4, single buffered']
    #allocation8 [shape = 'u8[65536]{0}', space=vmem, size = 0x10000, scoped, tag = 'input window, operand 6, single buffered']
    #allocation9 [shape = 's32[1]{0}', space=sflag, size = 0x4, scoped, tag = 'scoped memory for tpu_custom_call.1']
    #allocation10 [shape = 'u8[8192]{0}', space=vmem, size = 0x2000, scoped, tag = 'output window, operand 0']
    %13 = vsyncpa [#allocation3], 0
    %s14 = scalar_lea.sflag [#allocation3], 1
    %15 = vsyncpa %s14, 0
    %16 = vsyncpa [#allocation6], 0
    %17 = vsyncpa [#allocation9], 0
    %18 = vsyncpa [#allocation4], 0
    %s19 = scalar_lea.sflag [#allocation4], 1
    %20 = vsyncpa %s19, 0
    loop: start=0, step=1, limit=4
    $region2: #{tpu_custom_call.1} parent=1 // loop_pre_header
      _
    $region3: #{tpu_custom_call.1} parent=1 // loop_header
      %s22 = sphi 0, %s26
      %p23 = scmp.ge.s32.totalorder %s22, 4
      %s32 = sphi 0, %s34
      %s35 = sphi 0, %s32
      %s36 = sphi 0, %s35
      %s52 = sphi 0, %s36
      %s56 = sphi 0, %s56
      %s58 = sphi 0, %s56
      %s59 = sphi 0, %s58
      %s73 = sphi 0, %s59
      %s77 = sphi 0, %s77
      %s79 = sphi 0, %s77
      %s80 = sphi 0, %s79
      %s94 = sphi 0, %s80
      %s98 = sphi 0, %s98
      %s100 = sphi 0, %s98
      %s101 = sphi 0, %s100
      %s115 = sphi 0, %s101
      %s119 = sphi 0, %s119
      %s121 = sphi 0, %s119
      %s122 = sphi 0, %s121
      %s136 = sphi 0, %s122
      %s140 = sphi 0, %s140
      %s142 = sphi 0, %s140
      %s143 = sphi 0, %s142
      %s157 = sphi 0, %s143
      %s161 = sphi 0, %s161
      %s163 = sphi 0, %s161
      %s164 = sphi 0, %s163
      %s178 = sphi 0, %s164
      %s182 = sphi 0, %s182
      %s184 = sphi 0, %s182
      %s185 = sphi 0, %s184
      %s199 = sphi 0, %s185
      %s205 = sphi 0, %s207
      %s208 = sphi 0, %s205
      %s209 = sphi 0, %s208
      %s225 = sphi 0, %s209
    $region4: #{tpu_custom_call.1} parent=1 // loop_header_branch
      %25 = sbr.rel (%p23) target = $region8
    $region5: #{tpu_custom_call.1} parent=1 // loop_body
      %s27 = ssub.s32 %s22, 1
      %s28 = ssub.s32 %s22, 2
      %s29 = sadd.s32 %s22, 1
      %s30 = ssub.s32 %s22, %s29
      %p31 = scmp.eq.s32.totalorder %s30, 0
      %s33 = sadd.s32 %s32, 1
      %s34 = scalar_select %p31, %s32, %s33
      %p37 = pneg %p31
      %p38 = scmp.eq.s32.totalorder %s22, 1
      %p39 = por %p37, %p38
      %p40 = scmp.ne.s32.totalorder %s32, %s35
      %p41 = scmp.eq.s32.totalorder %s22, 0
      %p42 = por %p40, %p41
      %p43 = scmp.ne.s32.totalorder %s32, %s35
      %p44 = scmp.eq.s32.totalorder %s27, 1
      %p45 = por %p43, %p44
      %p46 = scmp.ne.s32.totalorder %s35, %s36
      %p47 = scmp.eq.s32.totalorder %s27, 0
      %p48 = por %p46, %p47
      %p49 = scmp.ne.s32.totalorder %s35, %s36
      %p50 = scmp.eq.s32.totalorder %s28, 1
      %p51 = por %p49, %p50
      %p53 = scmp.ne.s32.totalorder %s36, %s52
      %p54 = scmp.eq.s32.totalorder %s28, 0
      %p55 = por %p53, %p54
      %s57 = sadd.s32 %s56, 1
      %p60 = scmp.eq.s32.totalorder %s22, 1
      %p61 = scmp.ne.s32.totalorder %s56, %s58
      %p62 = scmp.eq.s32.totalorder %s22, 0
      %p63 = por %p61, %p62
      %p64 = scmp.ne.s32.totalorder %s56, %s58
      %p65 = scmp.eq.s32.totalorder %s27, 1
      %p66 = por %p64, %p65
      %p67 = scmp.ne.s32.totalorder %s58, %s59
      %p68 = scmp.eq.s32.totalorder %s27, 0
      %p69 = por %p67, %p68
      %p70 = scmp.ne.s32.totalorder %s58, %s59
      %p71 = scmp.eq.s32.totalorder %s28, 1
      %p72 = por %p70, %p71
      %p74 = scmp.ne.s32.totalorder %s59, %s73
      %p75 = scmp.eq.s32.totalorder %s28, 0
      %p76 = por %p74, %p75
      %s78 = sadd.s32 %s77, 1
      %p81 = scmp.eq.s32.totalorder %s22, 1
      %p82 = scmp.ne.s32.totalorder %s77, %s79
      %p83 = scmp.eq.s32.totalorder %s22, 0
      %p84 = por %p82, %p83
      %p85 = scmp.ne.s32.totalorder %s77, %s79
      %p86 = scmp.eq.s32.totalorder %s27, 1
      %p87 = por %p85, %p86
      %p88 = scmp.ne.s32.totalorder %s79, %s80
      %p89 = scmp.eq.s32.totalorder %s27, 0
      %p90 = por %p88, %p89
      %p91 = scmp.ne.s32.totalorder %s79, %s80
      %p92 = scmp.eq.s32.totalorder %s28, 1
      %p93 = por %p91, %p92
      %p95 = scmp.ne.s32.totalorder %s80, %s94
      %p96 = scmp.eq.s32.totalorder %s28, 0
      %p97 = por %p95, %p96
      %s99 = sadd.s32 %s98, 1
      %p102 = scmp.eq.s32.totalorder %s22, 1
      %p103 = scmp.ne.s32.totalorder %s98, %s100
      %p104 = scmp.eq.s32.totalorder %s22, 0
      %p105 = por %p103, %p104
      %p106 = scmp.ne.s32.totalorder %s98, %s100
      %p107 = scmp.eq.s32.totalorder %s27, 1
      %p108 = por %p106, %p107
      %p109 = scmp.ne.s32.totalorder %s100, %s101
      %p110 = scmp.eq.s32.totalorder %s27, 0
      %p111 = por %p109, %p110
      %p112 = scmp.ne.s32.totalorder %s100, %s101
      %p113 = scmp.eq.s32.totalorder %s28, 1
      %p114 = por %p112, %p113
      %p116 = scmp.ne.s32.totalorder %s101, %s115
      %p117 = scmp.eq.s32.totalorder %s28, 0
      %p118 = por %p116, %p117
      %s120 = sadd.s32 %s119, 1
      %p123 = scmp.eq.s32.totalorder %s22, 1
      %p124 = scmp.ne.s32.totalorder %s119, %s121
      %p125 = scmp.eq.s32.totalorder %s22, 0
      %p126 = por %p124, %p125
      %p127 = scmp.ne.s32.totalorder %s119, %s121
      %p128 = scmp.eq.s32.totalorder %s27, 1
      %p129 = por %p127, %p128
      %p130 = scmp.ne.s32.totalorder %s121, %s122
      %p131 = scmp.eq.s32.totalorder %s27, 0
      %p132 = por %p130, %p131
      %p133 = scmp.ne.s32.totalorder %s121, %s122
      %p134 = scmp.eq.s32.totalorder %s28, 1
      %p135 = por %p133, %p134
      %p137 = scmp.ne.s32.totalorder %s122, %s136
      %p138 = scmp.eq.s32.totalorder %s28, 0
      %p139 = por %p137, %p138
      %s141 = sadd.s32 %s140, 1
      %p144 = scmp.eq.s32.totalorder %s22, 1
      %p145 = scmp.ne.s32.totalorder %s140, %s142
      %p146 = scmp.eq.s32.totalorder %s22, 0
      %p147 = por %p145, %p146
      %p148 = scmp.ne.s32.totalorder %s140, %s142
      %p149 = scmp.eq.s32.totalorder %s27, 1
      %p150 = por %p148, %p149
      %p151 = scmp.ne.s32.totalorder %s142, %s143
      %p152 = scmp.eq.s32.totalorder %s27, 0
      %p153 = por %p151, %p152
      %p154 = scmp.ne.s32.totalorder %s142, %s143
      %p155 = scmp.eq.s32.totalorder %s28, 1
      %p156 = por %p154, %p155
      %p158 = scmp.ne.s32.totalorder %s143, %s157
      %p159 = scmp.eq.s32.totalorder %s28, 0
      %p160 = por %p158, %p159
      %s162 = sadd.s32 %s161, 1
      %p165 = scmp.eq.s32.totalorder %s22, 1
      %p166 = scmp.ne.s32.totalorder %s161, %s163
      %p167 = scmp.eq.s32.totalorder %s22, 0
      %p168 = por %p166, %p167
      %p169 = scmp.ne.s32.totalorder %s161, %s163
      %p170 = scmp.eq.s32.totalorder %s27, 1
      %p171 = por %p169, %p170
      %p172 = scmp.ne.s32.totalorder %s163, %s164
      %p173 = scmp.eq.s32.totalorder %s27, 0
      %p174 = por %p172, %p173
      %p175 = scmp.ne.s32.totalorder %s163, %s164
      %p176 = scmp.eq.s32.totalorder %s28, 1
      %p177 = por %p175, %p176
      %p179 = scmp.ne.s32.totalorder %s164, %s178
      %p180 = scmp.eq.s32.totalorder %s28, 0
      %p181 = por %p179, %p180
      %s183 = sadd.s32 %s182, 1
      %p186 = scmp.eq.s32.totalorder %s22, 1
      %p187 = scmp.ne.s32.totalorder %s182, %s184
      %p188 = scmp.eq.s32.totalorder %s22, 0
      %p189 = por %p187, %p188
      %p190 = scmp.ne.s32.totalorder %s182, %s184
      %p191 = scmp.eq.s32.totalorder %s27, 1
      %p192 = por %p190, %p191
      %p193 = scmp.ne.s32.totalorder %s184, %s185
      %p194 = scmp.eq.s32.totalorder %s27, 0
      %p195 = por %p193, %p194
      %p196 = scmp.ne.s32.totalorder %s184, %s185
      %p197 = scmp.eq.s32.totalorder %s28, 1
      %p198 = por %p196, %p197
      %p200 = scmp.ne.s32.totalorder %s185, %s199
      %p201 = scmp.eq.s32.totalorder %s28, 0
      %p202 = por %p200, %p201
      %s203 = ssub.s32 %s22, %s29
      %p204 = scmp.eq.s32.totalorder %s203, 0
      %s206 = sadd.s32 %s205, 1
      %s207 = scalar_select %p204, %s205, %s206
      %p210 = pneg %p204
      %p211 = scmp.eq.s32.totalorder %s22, 1
      %p212 = por %p210, %p211
      %p213 = scmp.ne.s32.totalorder %s205, %s208
      %p214 = scmp.eq.s32.totalorder %s22, 0
      %p215 = por %p213, %p214
      %p216 = scmp.ne.s32.totalorder %s205, %s208
      %p217 = scmp.eq.s32.totalorder %s27, 1
      %p218 = por %p216, %p217
      %p219 = scmp.ne.s32.totalorder %s208, %s209
      %p220 = scmp.eq.s32.totalorder %s27, 0
      %p221 = por %p219, %p220
      %p222 = scmp.ne.s32.totalorder %s208, %s209
      %p223 = scmp.eq.s32.totalorder %s28, 1
      %p224 = por %p222, %p223
      %p226 = scmp.ne.s32.totalorder %s209, %s225
      %p227 = scmp.eq.s32.totalorder %s28, 0
      %p228 = por %p226, %p227
      %p229 = scmp.le.s32.totalorder 1, %s22
      %p230 = scmp.lt.s32.totalorder %s22, 3
      %p231 = pnand %p229, %p230
      %p232 = pneg %p231
      // Predicated region
      $region9: #{tpu_custom_call.1} parent=5 // pred_check
        _
      $region10: #{tpu_custom_call.1} parent=5 // pred_check_branch
        %234 = sbr.rel (%p231) target = $region12
      $region11: #{tpu_custom_call.1} parent=5 // pred_region
        %s235 = ssub.s32 %s22, 1
        // Predicated region
        $region13: #{tpu_custom_call.1} parent=11 // pred_check
          %p236 = pneg %p69
        $region14: #{tpu_custom_call.1} parent=11 // pred_check_branch
          %238 = sbr.rel (%p236) target = $region16
        $region15: #{tpu_custom_call.1} parent=11 // pred_region
          %s240 = ssub.s32 1024, 1024
          %241 = vsyncadd [#allocation6], %s240
          %s242 = sshll.u32 [#allocation5], 4
          %s243 = int_to_ptr.vmem [resolvable:$true] %s242
          %248 = dma.hbm_to_vmem [thread:$0]  %s1, 1024, %s243, [#allocation6], 256, 256, 16
        $region16: #{tpu_custom_call.1} parent=11 // pred_fallthru
          _
        // Predicated region
        $region17: #{tpu_custom_call.1} parent=11 // pred_check
          %p249 = pneg %p90
        $region18: #{tpu_custom_call.1} parent=11 // pred_check_branch
          %251 = sbr.rel (%p249) target = $region20
        $region19: #{tpu_custom_call.1} parent=11 // pred_region
          _
        $region20: #{tpu_custom_call.1} parent=11 // pred_fallthru
          _
        // Predicated region
        $region21: #{tpu_custom_call.1} parent=11 // pred_check
          %p252 = pneg %p111
        $region22: #{tpu_custom_call.1} parent=11 // pred_check_branch
          %254 = sbr.rel (%p252) target = $region24
        $region23: #{tpu_custom_call.1} parent=11 // pred_region
          _
        $region24: #{tpu_custom_call.1} parent=11 // pred_fallthru
          _
        // Predicated region
        $region25: #{tpu_custom_call.1} parent=11 // pred_check
          %p255 = pneg %p132
        $region26: #{tpu_custom_call.1} parent=11 // pred_check_branch
          %257 = sbr.rel (%p255) target = $region28
        $region27: #{tpu_custom_call.1} parent=11 // pred_region
          %s259 = ssub.s32 2048, 2048
          %260 = vsyncadd [#allocation6], %s259
          %s261 = sshll.u32 [#allocation7], 4
          %s262 = int_to_ptr.vmem [resolvable:$true] %s261
          %267 = dma.hbm_to_vmem [thread:$0]  %s4, 2048, %s262, [#allocation6], 128, 128, 8
        $region28: #{tpu_custom_call.1} parent=11 // pred_fallthru
          _
        // Predicated region
        $region29: #{tpu_custom_call.1} parent=11 // pred_check
          %p268 = pneg %p153
        $region30: #{tpu_custom_call.1} parent=11 // pred_check_branch
          %270 = sbr.rel (%p268) target = $region32
        $region31: #{tpu_custom_call.1} parent=11 // pred_region
          _
        $region32: #{tpu_custom_call.1} parent=11 // pred_fallthru
          _
        // Predicated region
        $region33: #{tpu_custom_call.1} parent=11 // pred_check
          %p271 = pneg %p174
        $region34: #{tpu_custom_call.1} parent=11 // pred_check_branch
          %273 = sbr.rel (%p271) target = $region36
        $region35: #{tpu_custom_call.1} parent=11 // pred_region
          %s275 = ssub.s32 2048, 2048
          %276 = vsyncadd [#allocation9], %s275
          %s277 = sshll.u32 [#allocation8], 4
          %s278 = int_to_ptr.vmem [resolvable:$true] %s277
          %283 = dma.hbm_to_vmem [thread:$0]  %s6, 2048, %s278, [#allocation9], 128, 128, 8
        $region36: #{tpu_custom_call.1} parent=11 // pred_fallthru
          _
        // Predicated region
        $region37: #{tpu_custom_call.1} parent=11 // pred_check
          %p284 = pneg %p195
        $region38: #{tpu_custom_call.1} parent=11 // pred_check_branch
          %286 = sbr.rel (%p284) target = $region40
        $region39: #{tpu_custom_call.1} parent=11 // pred_region
          _
        $region40: #{tpu_custom_call.1} parent=11 // pred_fallthru
          _
      $region12: #{tpu_custom_call.1} parent=5 // pred_fallthru
        _
      %p287 = scmp.lt.s32.totalorder %s22, 2
      // Predicated region
      $region41: #{tpu_custom_call.1} parent=5 // pred_check
        %p288 = pneg %p287
      $region42: #{tpu_custom_call.1} parent=5 // pred_check_branch
        %290 = sbr.rel (%p288) target = $region44
      $region43: #{tpu_custom_call.1} parent=5 // pred_region
        // Predicated region
        $region45: #{tpu_custom_call.1} parent=43 // pred_check
          %p291 = pneg %p42
        $region46: #{tpu_custom_call.1} parent=43 // pred_check_branch
          %293 = sbr.rel (%p291) target = $region48
        $region47: #{tpu_custom_call.1} parent=43 // pred_region
          %s294 = sand.u32 %s32, 1
          %s295 = scalar_lea.sflag [#allocation3], %s294
          %s296 = sand.u32 %s32, 1
          %s297 = smul.addr %s296, 8
          %s298 = scalar_lea.vmem [#allocation2], %s297
          %s300 = ssub.s32 128, 128
          %301 = vsyncadd %s295, %s300
          %s302 = smul.addr %s22, 128
          %s303 = scalar_lea.hbm %s0, %s302
          %s305 = sshll.u32 %s298, 4
          %s306 = int_to_ptr.vmem [resolvable:$true] %s305
          %308 = dma.hbm_to_vmem [thread:$0]  %s303, 128, %s306, %s295
        $region48: #{tpu_custom_call.1} parent=43 // pred_fallthru
          _
      $region44: #{tpu_custom_call.1} parent=5 // pred_fallthru
        _
      %p309 = scmp.le.s32.totalorder 1, %s22
      %p310 = scmp.lt.s32.totalorder %s22, 3
      %p311 = pnand %p309, %p310
      %p312 = pneg %p311
      // Predicated region
      $region49: #{tpu_custom_call.1} parent=5 // pred_check
        _
      $region50: #{tpu_custom_call.1} parent=5 // pred_check_branch
        %314 = sbr.rel (%p311) target = $region52
      $region51: #{tpu_custom_call.1} parent=5 // pred_region
        %s315 = ssub.s32 %s22, 1
        %s316 = sand.u32 %s35, 1
        %s317 = scalar_lea.sflag [#allocation3], %s316
        %s318 = sand.u32 %s35, 1
        %s319 = smul.addr %s318, 8
        %s320 = scalar_lea.vmem [#allocation2], %s319
        // Predicated region
        $region53: #{tpu_custom_call.1} parent=51 // pred_check
          %p321 = pneg %p48
        $region54: #{tpu_custom_call.1} parent=51 // pred_check_branch
          %323 = sbr.rel (%p321) target = $region56
        $region55: #{tpu_custom_call.1} parent=51 // pred_region
          %324 = dma.done %s317, 128
        $region56: #{tpu_custom_call.1} parent=51 // pred_fallthru
          _
        // Predicated region
        $region57: #{tpu_custom_call.1} parent=51 // pred_check
          %p325 = pneg %p69
        $region58: #{tpu_custom_call.1} parent=51 // pred_check_branch
          %327 = sbr.rel (%p325) target = $region60
        $region59: #{tpu_custom_call.1} parent=51 // pred_region
          %328 = dma.done [#allocation6], 1024
        $region60: #{tpu_custom_call.1} parent=51 // pred_fallthru
          _
        // Predicated region
        $region61: #{tpu_custom_call.1} parent=51 // pred_check
          %p329 = pneg %p132
        $region62: #{tpu_custom_call.1} parent=51 // pred_check_branch
          %331 = sbr.rel (%p329) target = $region64
        $region63: #{tpu_custom_call.1} parent=51 // pred_region
          %332 = dma.done [#allocation6], 2048
        $region64: #{tpu_custom_call.1} parent=51 // pred_fallthru
          _
        // Predicated region
        $region65: #{tpu_custom_call.1} parent=51 // pred_check
          %p333 = pneg %p174
        $region66: #{tpu_custom_call.1} parent=51 // pred_check_branch
          %335 = sbr.rel (%p333) target = $region68
        $region67: #{tpu_custom_call.1} parent=51 // pred_region
          %336 = dma.done [#allocation9], 2048
        $region68: #{tpu_custom_call.1} parent=51 // pred_fallthru
          _
        %s337 = sand.u32 %s35, 1
        %s338 = scalar_lea.sflag [#allocation3], %s337
        %s339 = sand.u32 %s35, 1
        %s340 = smul.addr %s339, 8
        %s341 = scalar_lea.vmem [#allocation2], %s340
        %p342 = pneg %p48
        %p343 = pneg %p45
        %p344 = pneg %p69
        %p345 = pneg %p66
        %p346 = pneg %p90
        %p347 = pneg %p87
        %p348 = pneg %p111
        %p349 = pneg %p108
        %p350 = pneg %p132
        %p351 = pneg %p129
        %p352 = pneg %p153
        %p353 = pneg %p150
        %p354 = pneg %p174
        %p355 = pneg %p171
        %p356 = pneg %p195
        %p357 = pneg %p192
        %p358 = pneg %p221
        %p359 = pneg %p218
        %s360 = sand.u32 %s208, 1
        %s361 = scalar_lea.sflag [#allocation4], %s360
        %s362 = sand.u32 %s208, 1
        %s363 = smul.addr %s362, 8
        %s364 = scalar_lea.vmem [#allocation10], %s363
        %v365 = vld [vmem:[%s320] sm:$0xff]
        %v366 = vld [vmem:[#allocation5] sm:$0xff]
        %v367 = vld [vmem:[#allocation5 + $0x8] sm:$0xff]
        %v368 = vld [vmem:[#allocation5 + $0x10] sm:$0xff]
        %v369 = vld [vmem:[#allocation5 + $0x18] sm:$0xff]
        %v370 = vld [vmem:[#allocation5 + $0x20] sm:$0xff]
        %v371 = vld [vmem:[#allocation5 + $0x28] sm:$0xff]
        %v372 = vld [vmem:[#allocation5 + $0x30] sm:$0xff]
        %v373 = vld [vmem:[#allocation5 + $0x38] sm:$0xff]
        %v374 = vld [vmem:[%s2] sm:$0x3]
        %v376 = vlaneseq
        %v377 = vshrl.u32 %v376, 7
        %v378 = vsub.s32 0, %v377
        %v379 = vrot.slane %v374, %v378
        %v380 = vlaneseq
        %v381 = vshrl.u32 %v380, 7
        %v382 = vsub.s32 1, %v381
        %v383 = vrot.slane %v374, %v382
        %vm386 = vcmask 261120
        %v388 = vsel %vm386, %v365, 0
        %390 = vmatprep.subr.mxu0 %v367
        %391 = vmatpush1.msra.mxu0 %v366
        %392 = vmatprep.subr.mxu0 %v369
        %393 = vmatpush1.msra.mxu0 %v368
        %394 = vmatprep.subr.mxu0 %v371
        %395 = vmatpush1.msra.mxu0 %v370
        %396 = vmatprep.subr.mxu0 %v373
        %397 = vmatpush1.msra.mxu0 %v372
        %398 = vmatprep.subr.mxu0 0.0
        %399 = vmatpush1.msra.mxu0 0.0
        %400 = vmatprep.subr.mxu0 0.0
        %401 = vmatpush1.msra.mxu0 0.0
        %402 = vmatprep.subr.mxu0 0.0
        %403 = vmatpush1.msra.mxu0 0.0
        %404 = vmatprep.subr.mxu0 0.0
        %405 = vmatpush1.msra.mxu0 0.0
        %406 = vmatprep.subr.mxu0 0.0
        %407 = vmatpush1.msra.mxu0 0.0
        %408 = vmatprep.subr.mxu0 0.0
        %409 = vmatpush1.msra.mxu0 0.0
        %410 = vmatprep.subr.mxu0 0.0
        %411 = vmatpush1.msra.mxu0 0.0
        %412 = vmatprep.subr.mxu0 0.0
        %413 = vmatpush1.msra.mxu0 0.0
        %414 = vmatprep.subr.mxu0 0.0
        %415 = vmatpush1.msra.mxu0 0.0
        %416 = vmatprep.subr.mxu0 0.0
        %417 = vmatpush1.msra.mxu0 0.0
        %418 = vmatprep.subr.mxu0 0.0
        %419 = vmatpush1.msra.mxu0 0.0
        %420 = vmatprep.subr.mxu0 0.0
        %421 = vmatpush1.msra.mxu0 0.0
        %422 = vmatprep.subr.mxu0 0.0
        %423 = vmatpush1.msra.mxu0 0.0
        %424 = vmatprep.subr.mxu0 0.0
        %425 = vmatpush1.msra.mxu0 0.0
        %426 = vmatprep.subr.mxu0 0.0
        %427 = vmatpush1.msra.mxu0 0.0
        %428 = vmatprep.subr.mxu0 0.0
        %429 = vmatpush1.msra.mxu0 0.0
        %430 = vmatprep.subr.mxu0 0.0
        %431 = vmatpush1.msra.mxu0 0.0
        %432 = vmatprep.subr.mxu0 0.0
        %433 = vmatpush1.msra.mxu0 0.0
        %434 = vmatprep.subr.mxu0 0.0
        %435 = vmatpush1.msra.mxu0 0.0
        %436 = vmatprep.subr.mxu0 0.0
        %437 = vmatpush1.msra.mxu0 0.0
        %438 = vmatprep.subr.mxu0 0.0
        %439 = vmatpush1.msra.mxu0 0.0
        %440 = vmatprep.subr.mxu0 0.0
        %441 = vmatpush1.msra.mxu0 0.0
        %442 = vmatprep.subr.mxu0 0.0
        %443 = vmatpush1.msra.mxu0 0.0
        %444 = vmatprep.subr.mxu0 0.0
        %445 = vmatpush1.msra.mxu0 0.0
        %446 = vmatprep.subr.mxu0 0.0
        %447 = vmatpush1.msra.mxu0 0.0
        %448 = vmatprep.subr.mxu0 0.0
        %449 = vmatpush1.msra.mxu0 0.0
        %450 = vmatprep.subr.mxu0 0.0
        %451 = vmatpush1.msra.mxu0 0.0
        %452 = vmatprep.subr.mxu0 0.0
        %453 = vmatpush1.msra.mxu0 0.0
        %454 = vmatprep.mubr.f32.mxu0 0.0
        %455 = vmatmul.mubr.f32.gmra.mrb[0].mxu0 %v388
        %v456 = vpop.f32.mrb[0].mxu0
        %v457 = vadd.f32 %v379, %v456
        %v458 = vpop.f32.mrb[0].mxu0
        %v459 = vadd.f32 %v383, %v458
        %460 = vdwg.mxu0
        %v461 = vmul.f32 %v457, %v457
        %462 = vadd.xlane.f32.xlu0 %v461
        %v463 = vpop.xlane.xlu0 %462
        %v464 = vmax.f32 %v463, 1e-24
        %v465 = vrsqrt.pop %v464
        %v466 = vmul.f32 %v457, %v465
        %v467 = vmul.f32 %v459, %v459
        %468 = vadd.xlane.f32.xlu0 %v467
        %v469 = vpop.xlane.xlu0 %468
        %v470 = vmax.f32 %v469, 1e-24
        %v471 = vrsqrt.pop %v470
        %v472 = vmul.f32 %v459, %v471
        %v473 = vld [vmem:[%s3] sm:$0x1]
        %v475 = vlaneseq
        %v476 = vshrl.u32 %v475, 7
        %v477 = vsub.s32 0, %v476
        %v478 = vrot.slane %v473, %v477
        %v480 = vmul.f32 %v466, %v478
        %481 = vadd.xlane.f32.xlu0 %v480
        %v482 = vpop.xlane.xlu0 %481
        %v483 = vmul.f32 %v482, %v482
        %v484 = vrot.slane %v483, 4
        %v485 = vadd.f32 %v483, %v484
        %v486 = vrot.slane %v485, 2
        %v487 = vadd.f32 %v485, %v486
        %v488 = vrot.slane %v487, 1
        %v489 = vadd.f32 %v487, %v488
        %v490 = vmax.f32 %v489, 1e-24
        %v491 = vrsqrt.pop %v490
        %v492 = vmul.f32 %v482, %v491
        %v493 = vmul.f32 %v492, %v466
        %v494 = vrot.slane %v493, 4
        %v495 = vadd.f32 %v493, %v494
        %v496 = vrot.slane %v495, 2
        %v497 = vadd.f32 %v495, %v496
        %v498 = vrot.slane %v497, 1
        %v499 = vadd.f32 %v497, %v498
        %v500 = vmul.f32 %v499, %v472
        %v501 = vld [vmem:[#allocation7] sm:$0xff]
        %v502 = vld [vmem:[#allocation7 + $0x8] sm:$0xff]
        %v503 = vld [vmem:[#allocation7 + $0x10] sm:$0xff]
        %v504 = vld [vmem:[#allocation7 + $0x18] sm:$0xff]
        %v505 = vld [vmem:[#allocation7 + $0x20] sm:$0xff]
        %v506 = vld [vmem:[#allocation7 + $0x28] sm:$0xff]
        %v507 = vld [vmem:[#allocation7 + $0x30] sm:$0xff]
        %v508 = vld [vmem:[#allocation7 + $0x38] sm:$0xff]
        %v509 = vld [vmem:[#allocation7 + $0x40] sm:$0xff]
        %v510 = vld [vmem:[#allocation7 + $0x48] sm:$0xff]
        %v511 = vld [vmem:[#allocation7 + $0x50] sm:$0xff]
        %v512 = vld [vmem:[#allocation7 + $0x58] sm:$0xff]
        %v513 = vld [vmem:[#allocation7 + $0x60] sm:$0xff]
        %v514 = vld [vmem:[#allocation7 + $0x68] sm:$0xff]
        %v515 = vld [vmem:[#allocation7 + $0x70] sm:$0xff]
        %v516 = vld [vmem:[#allocation7 + $0x78] sm:$0xff]
        %v517 = vld [vmem:[%s5] sm:$0x1]
        %v519 = vlaneseq
        %v520 = vshrl.u32 %v519, 7
        %v521 = vsub.s32 0, %v520
        %v522 = vrot.slane %v517, %v521
        %524 = vmatprep.subr.mxu0 0.0
        %525 = vmatpush1.msra.mxu0 %v501
        %526 = vmatprep.subr.mxu0 0.0
        %527 = vmatpush1.msra.mxu0 %v502
        %528 = vmatprep.subr.mxu0 0.0
        %529 = vmatpush1.msra.mxu0 %v503
        %530 = vmatprep.subr.mxu0 0.0
        %531 = vmatpush1.msra.mxu0 %v504
        %532 = vmatprep.subr.mxu0 0.0
        %533 = vmatpush1.msra.mxu0 %v505
        %534 = vmatprep.subr.mxu0 0.0
        %535 = vmatpush1.msra.mxu0 %v506
        %536 = vmatprep.subr.mxu0 0.0
        %537 = vmatpush1.msra.mxu0 %v507
        %538 = vmatprep.subr.mxu0 0.0
        %539 = vmatpush1.msra.mxu0 %v508
        %540 = vmatprep.subr.mxu0 0.0
        %541 = vmatpush1.msra.mxu0 %v509
        %542 = vmatprep.subr.mxu0 0.0
        %543 = vmatpush1.msra.mxu0 %v510
        %544 = vmatprep.subr.mxu0 0.0
        %545 = vmatpush1.msra.mxu0 %v511
        %546 = vmatprep.subr.mxu0 0.0
        %547 = vmatpush1.msra.mxu0 %v512
        %548 = vmatprep.subr.mxu0 0.0
        %549 = vmatpush1.msra.mxu0 %v513
        %550 = vmatprep.subr.mxu0 0.0
        %551 = vmatpush1.msra.mxu0 %v514
        %552 = vmatprep.subr.mxu0 0.0
        %553 = vmatpush1.msra.mxu0 %v515
        %554 = vmatprep.subr.mxu0 0.0
        %555 = vmatpush1.msra.mxu0 %v516
        %556 = vmatprep.subr.mxu0 0.0
        %557 = vmatpush1.msra.mxu0 0.0
        %558 = vmatprep.subr.mxu0 0.0
        %559 = vmatpush1.msra.mxu0 0.0
        %560 = vmatprep.subr.mxu0 0.0
        %561 = vmatpush1.msra.mxu0 0.0
        %562 = vmatprep.subr.mxu0 0.0
        %563 = vmatpush1.msra.mxu0 0.0
        %564 = vmatprep.subr.mxu0 0.0
        %565 = vmatpush1.msra.mxu0 0.0
        %566 = vmatprep.subr.mxu0 0.0
        %567 = vmatpush1.msra.mxu0 0.0
        %568 = vmatprep.subr.mxu0 0.0
        %569 = vmatpush1.msra.mxu0 0.0
        %570 = vmatprep.subr.mxu0 0.0
        %571 = vmatpush1.msra.mxu0 0.0
        %572 = vmatprep.subr.mxu0 0.0
        %573 = vmatpush1.msra.mxu0 0.0
        %574 = vmatprep.subr.mxu0 0.0
        %575 = vmatpush1.msra.mxu0 0.0
        %576 = vmatprep.subr.mxu0 0.0
        %577 = vmatpush1.msra.mxu0 0.0
        %578 = vmatprep.subr.mxu0 0.0
        %579 = vmatpush1.msra.mxu0 0.0
        %580 = vmatprep.subr.mxu0 0.0
        %581 = vmatpush1.msra.mxu0 0.0
        %582 = vmatprep.subr.mxu0 0.0
        %583 = vmatpush1.msra.mxu0 0.0
        %584 = vmatprep.subr.mxu0 0.0
        %585 = vmatpush1.msra.mxu0 0.0
        %586 = vmatprep.subr.mxu0 0.0
        %587 = vmatpush1.msra.mxu0 0.0
        %588 = vmatprep.mubr.f32.mxu0 0.0
        %589 = vmatmul.mubr.f32.gmra.mrb[0].mxu0 %v500
        %v590 = vpop.f32.mrb[0].mxu0
        %v591 = vadd.f32 %v522, %v590
        %v592 = vpop.f32.mrb[0].mxu0
        %593 = vdwg.mxu0
        %v594 = vadd.f32 %v591, %v466
        %v595 = vld [vmem:[#allocation8] sm:$0xff]
        %v596 = vld [vmem:[#allocation8 + $0x8] sm:$0xff]
        %v597 = vld [vmem:[#allocation8 + $0x10] sm:$0xff]
        %v598 = vld [vmem:[#allocation8 + $0x18] sm:$0xff]
        %v599 = vld [vmem:[#allocation8 + $0x20] sm:$0xff]
        %v600 = vld [vmem:[#allocation8 + $0x28] sm:$0xff]
        %v601 = vld [vmem:[#allocation8 + $0x30] sm:$0xff]
        %v602 = vld [vmem:[#allocation8 + $0x38] sm:$0xff]
        %v603 = vld [vmem:[#allocation8 + $0x40] sm:$0xff]
        %v604 = vld [vmem:[#allocation8 + $0x48] sm:$0xff]
        %v605 = vld [vmem:[#allocation8 + $0x50] sm:$0xff]
        %v606 = vld [vmem:[#allocation8 + $0x58] sm:$0xff]
        %v607 = vld [vmem:[#allocation8 + $0x60] sm:$0xff]
        %v608 = vld [vmem:[#allocation8 + $0x68] sm:$0xff]
        %v609 = vld [vmem:[#allocation8 + $0x70] sm:$0xff]
        %v610 = vld [vmem:[#allocation8 + $0x78] sm:$0xff]
        %v611 = vld [vmem:[%s7] sm:$0x1]
        %v613 = vlaneseq
        %v614 = vshrl.u32 %v613, 7
        %v615 = vsub.s32 0, %v614
        %v616 = vrot.slane %v611, %v615
        %618 = vmatprep.subr.mxu0 0.0
        %619 = vmatpush1.msra.mxu0 %v595
        %620 = vmatprep.subr.mxu0 0.0
        %621 = vmatpush1.msra.mxu0 %v596
        %622 = vmatprep.subr.mxu0 0.0
        %623 = vmatpush1.msra.mxu0 %v597
        %624 = vmatprep.subr.mxu0 0.0
        %625 = vmatpush1.msra.mxu0 %v598
        %626 = vmatprep.subr.mxu0 0.0
        %627 = vmatpush1.msra.mxu0 %v599
        %628 = vmatprep.subr.mxu0 0.0
        %629 = vmatpush1.msra.mxu0 %v600
        %630 = vmatprep.subr.mxu0 0.0
        %631 = vmatpush1.msra.mxu0 %v601
        %632 = vmatprep.subr.mxu0 0.0
        %633 = vmatpush1.msra.mxu0 %v602
        %634 = vmatprep.subr.mxu0 0.0
        %635 = vmatpush1.msra.mxu0 %v603
        %636 = vmatprep.subr.mxu0 0.0
        %637 = vmatpush1.msra.mxu0 %v604
        %638 = vmatprep.subr.mxu0 0.0
        %639 = vmatpush1.msra.mxu0 %v605
        %640 = vmatprep.subr.mxu0 0.0
        %641 = vmatpush1.msra.mxu0 %v606
        %642 = vmatprep.subr.mxu0 0.0
        %643 = vmatpush1.msra.mxu0 %v607
        %644 = vmatprep.subr.mxu0 0.0
        %645 = vmatpush1.msra.mxu0 %v608
        %646 = vmatprep.subr.mxu0 0.0
        %647 = vmatpush1.msra.mxu0 %v609
        %648 = vmatprep.subr.mxu0 0.0
        %649 = vmatpush1.msra.mxu0 %v610
        %650 = vmatprep.subr.mxu0 0.0
        %651 = vmatpush1.msra.mxu0 0.0
        %652 = vmatprep.subr.mxu0 0.0
        %653 = vmatpush1.msra.mxu0 0.0
        %654 = vmatprep.subr.mxu0 0.0
        %655 = vmatpush1.msra.mxu0 0.0
        %656 = vmatprep.subr.mxu0 0.0
        %657 = vmatpush1.msra.mxu0 0.0
        %658 = vmatprep.subr.mxu0 0.0
        %659 = vmatpush1.msra.mxu0 0.0
        %660 = vmatprep.subr.mxu0 0.0
        %661 = vmatpush1.msra.mxu0 0.0
        %662 = vmatprep.subr.mxu0 0.0
        %663 = vmatpush1.msra.mxu0 0.0
        %664 = vmatprep.subr.mxu0 0.0
        %665 = vmatpush1.msra.mxu0 0.0
        %666 = vmatprep.subr.mxu0 0.0
        %667 = vmatpush1.msra.mxu0 0.0
        %668 = vmatprep.subr.mxu0 0.0
        %669 = vmatpush1.msra.mxu0 0.0
        %670 = vmatprep.subr.mxu0 0.0
        %671 = vmatpush1.msra.mxu0 0.0
        %672 = vmatprep.subr.mxu0 0.0
        %673 = vmatpush1.msra.mxu0 0.0
        %674 = vmatprep.subr.mxu0 0.0
        %675 = vmatpush1.msra.mxu0 0.0
        %676 = vmatprep.subr.mxu0 0.0
        %677 = vmatpush1.msra.mxu0 0.0
        %678 = vmatprep.subr.mxu0 0.0
        %679 = vmatpush1.msra.mxu0 0.0
        %680 = vmatprep.subr.mxu0 0.0
        %681 = vmatpush1.msra.mxu0 0.0
        %682 = vmatprep.mubr.f32.mxu0 0.0
        %683 = vmatmul.mubr.f32.gmra.mrb[0].mxu0 %v594
        %v684 = vpop.f32.mrb[0].mxu0
        %v685 = vadd.f32 %v616, %v684
        %v686 = vpop.f32.mrb[0].mxu0
        %687 = vdwg.mxu0
        %688 = vst [vmem:[%s364] sm:$0xff] %v685
        %s689 = sand.u32 %s208, 1
        %s690 = scalar_lea.sflag [#allocation4], %s689
        %s691 = sand.u32 %s208, 1
        %s692 = smul.addr %s691, 8
        %s693 = scalar_lea.vmem [#allocation10], %s692
        // Predicated region
        $region69: #{tpu_custom_call.1} parent=51 // pred_check
          %p694 = pneg %p218
        $region70: #{tpu_custom_call.1} parent=51 // pred_check_branch
          %696 = sbr.rel (%p694) target = $region72
        $region71: #{tpu_custom_call.1} parent=51 // pred_region
          %s698 = ssub.s32 128, 128
          %699 = vsyncadd %s690, %s698
          %s700 = smul.addr %s27, 128
          %s701 = scalar_lea.hbm %s8, %s700
          %s703 = sshll.u32 %s693, 4
          %s704 = int_to_ptr.vmem [resolvable:$true] %s703
          %706 = dma.vmem_to_hbm [thread:$0]  %s704, 128, %s701, %s690
        $region72: #{tpu_custom_call.1} parent=51 // pred_fallthru
          _
      $region52: #{tpu_custom_call.1} parent=5 // pred_fallthru
        _
      %p707 = scmp.le.s32.totalorder 2, %s22
      // Predicated region
      $region73: #{tpu_custom_call.1} parent=5 // pred_check
        %p708 = pneg %p707
      $region74: #{tpu_custom_call.1} parent=5 // pred_check_branch
        %710 = sbr.rel (%p708) target = $region76
      $region75: #{tpu_custom_call.1} parent=5 // pred_region
        %s711 = ssub.s32 %s22, 2
        // Predicated region
        $region77: #{tpu_custom_call.1} parent=75 // pred_check
          %p712 = pneg %p224
        $region78: #{tpu_custom_call.1} parent=75 // pred_check_branch
          %714 = sbr.rel (%p712) target = $region80
        $region79: #{tpu_custom_call.1} parent=75 // pred_region
          %s715 = sand.u32 %s209, 1
          %s716 = scalar_lea.sflag [#allocation4], %s715
          %s717 = sand.u32 %s209, 1
          %s718 = smul.addr %s717, 8
          %s719 = scalar_lea.vmem [#allocation10], %s718
          %720 = dma.done %s716, 128
        $region80: #{tpu_custom_call.1} parent=75 // pred_fallthru
          _
      $region76: #{tpu_custom_call.1} parent=5 // pred_fallthru
        _
    $region6: #{tpu_custom_call.1} parent=1 // loop_footer
      %s26 = sadd.s32 1, %s22
    $region7: #{tpu_custom_call.1} parent=1 // loop_footer_branch
      %21 = sbr.rel target = $region3
    $region8: #{tpu_custom_call.1} parent=1 // loop_exit
      _
    %721 = vsyncpa [#allocation3], 1
    %s722 = scalar_lea.sflag [#allocation3], 1
    %723 = vsyncpa %s722, 1
    %724 = vsyncpa [#allocation6], 1
    %725 = vsyncpa [#allocation9], 1
    %726 = vsyncpa [#allocation4], 1
    %s727 = scalar_lea.sflag [#allocation4], 1
    %728 = vsyncpa %s727, 1

</llo_original>
